<compile_context>
chip_gen: v5e
topology: v5e:2x2
jax: 0.10.0
libtpu: 0.0.40
codegen_flags: <defaults>
</compile_context>

<pallas_src>
import numpy as np
import jax
import jax.numpy as jnp
from jax import lax
from jax.experimental import pallas as pl
from jax.experimental.pallas import tpu as pltpu

# ----------------------------------------------------------------------------
# Fixed filter bank (identical to the module's __init__)
# ----------------------------------------------------------------------------
FILTERS = np.array(
    [
        [[0, 0, 0], [0, 1, 0], [0, 0, 0]],
        [[0, 0, 0], [0, -1, 1], [0, 0, 0]],
        [[0, -1, 0], [-1, 5, -1], [0, -1, 0]],
        [[0, 1, 0], [1, -4, 1], [0, 1, 0]],
    ],
    dtype=np.float32,
)
NUM_K = FILTERS.shape[0]


# ----------------------------------------------------------------------------
# Per-generation VMEM budgets (review items: v7x 64 MiB vs v5e/v6e 128 MiB).
# ----------------------------------------------------------------------------
_BUDGET_CACHE = None


def _tpu_budgets():
    """Returns (vmem_limit_bytes, block_budget_bytes, min_parallel_steps)."""
    global _BUDGET_CACHE
    if _BUDGET_CACHE is not None:
        return _BUDGET_CACHE
    cap = None
    try:
        cap = int(getattr(pltpu.get_tpu_info(), "vmem_capacity_bytes", 0)) or None
    except Exception:
        cap = None
    if cap is None:
        cap = 64 * 1024 * 1024                       # conservative: assume v7x
    if cap >= 100 * 1024 * 1024:                     # v5e / v6e: 128 MiB, 1 TC
        _BUDGET_CACHE = (96 * 1024 * 1024, 48 * 1024 * 1024, 1)
    else:                                            # v7x: 64 MiB, 2 TCs
        _BUDGET_CACHE = (40 * 1024 * 1024, 20 * 1024 * 1024, 2)
    return _BUDGET_CACHE


def _ceil_to(x, m):
    return ((x + m - 1) // m) * m


def _largest_divisor_leq(n, cap):
    cap = max(1, min(cap, n))
    for d in range(cap, 0, -1):
        if n % d == 0:
            return d
    return 1


# ----------------------------------------------------------------------------
# Host-side filter FFTs, packed for the interleaved-complex kernel.
#   ka[k, 2j] = ka[k, 2j+1] = Re(FFT)[k, j]
#   kb[k, 2j] = -Im(FFT)[k, j],  kb[k, 2j+1] = +Im(FFT)[k, j]
# Cached per image_size.
# ----------------------------------------------------------------------------
_FFT_KERNEL_CACHE = {}


def _fft_re_im(H, W):
    kre = np.zeros((NUM_K, H * W), dtype=np.float32)
    kim = np.zeros((NUM_K, H * W), dtype=np.float32)
    for k in range(NUM_K):
        padded = np.zeros((H, W), dtype=np.float32)
        padded[:3, :3] = FILTERS[k]
        fk = np.fft.fft2(padded)
        kre[k] = np.real(fk).astype(np.float32).reshape(-1)
        kim[k] = np.imag(fk).astype(np.float32).reshape(-1)
    return kre, kim


def get_fft_filters(image_size):
    H, W = int(image_size[1]), int(image_size[0])
    key = (H, W)
    if key not in _FFT_KERNEL_CACHE:
        kre, kim = _fft_re_im(H, W)
        ka = np.repeat(kre, 2, axis=1)                     # [kr, kr, kr, kr, ...]
        kb = np.zeros((NUM_K, 2 * H * W), dtype=np.float32)
        kb[:, 0::2] = -kim
        kb[:, 1::2] = kim
        _FFT_KERNEL_CACHE[key] = (jnp.asarray(ka), jnp.asarray(kb))
    return _FFT_KERNEL_CACHE[key]


# ----------------------------------------------------------------------------
# Tile pickers (trace-time, static shapes only)
# ----------------------------------------------------------------------------
def _pick_conv_batch(B, H, W2, budget, min_steps):
    per_img = _ceil_to(H, 8) * _ceil_to(W2, 128) * 4
    # in + out blocks double-buffered + ~7 live full-size intermediates
    per_b = per_img * ((1 + NUM_K) * 2 + 7)
    cap = max(1, budget // per_b)
    if min_steps >= 2 and B >= 2:          # v7x only: feed both TensorCores
        cap = min(cap, B // 2)
    return _largest_divisor_leq(B, cap)


def _pick_fft_tiles(B, C, HW2, budget, min_steps):
    def fits(tc, lane):
        tcp = _ceil_to(tc, 8)
        words = (2 * tcp * lane                # f block (double-buffered)
                 + 2 * 2 * 8 * lane            # ka + kb blocks (double-buffered)
                 + 2 * NUM_K * tcp * lane      # out block (double-buffered)
                 + (3 + NUM_K) * tcp * lane)   # live intermediates
        return words * 4 <= budget

    if C % 8 == 0:
        tc_opts = [d for d in range(8, C + 1, 8) if C % d == 0]
    else:
        # TODO(synk): pad C to a multiple of 8 for very large non-8-multiple coil counts.
        tc_opts = [C]
    if HW2 % 128 == 0:
        unit, n_units = 128, HW2 // 128
    else:
        # TODO(synk): pad H*W*2 to a multiple of 128 instead of whole-axis blocks.
        unit, n_units = HW2, 1

    tc = tc_opts[0]
    for cand in tc_opts:
        if fits(cand, unit):
            tc = cand
    lane_units = 1
    for m in range(1, n_units + 1):
        if n_units % m == 0 and fits(tc, m * unit):
            lane_units = m
    lane = lane_units * unit

    # v7x only: make sure both TensorCores get work; prefer splitting the
    # channel axis over shrinking the lane tile.
    if min_steps >= 2:
        steps = (HW2 // lane) * B * (C // tc)
        if steps < 2:
            if len(tc_opts) >= 2 and tc == tc_opts[-1]:
                tc = tc_opts[-2]
            elif lane_units % 2 == 0:
                lane = (lane_units // 2) * unit
    return tc, lane


# ----------------------------------------------------------------------------
# Pallas kernel 1: 3x3 conv (cross-correlation, padding=1) with 4 fixed filters,
# applied per complex component on the interleaved (H, 2W) layout.
#   u_ref : (TB, H, 2W)        o_ref : (TB, K, H, 2W)
# x-shifts move by 2 lanes (components never mix); y-shifts move by 1 sublane.
# The zero halo is realised by concatenating a zero border in registers.
# ----------------------------------------------------------------------------
def _conv_kernel(u_ref, o_ref):
    u = u_ref[...]
    TB, H, W2 = u.shape
    zrow = jnp.zeros((TB, 1, W2), u.dtype)
    zcol = jnp.zeros((TB, H, 2), u.dtype)
    win = {
        (0, 0): u,
        (-1, 0): jnp.concatenate([zrow, u[:, : H - 1, :]], axis=1),   # u[y-1, x]
        (1, 0): jnp.concatenate([u[:, 1:, :], zrow], axis=1),         # u[y+1, x]
        (0, -1): jnp.concatenate([zcol, u[:, :, : W2 - 2]], axis=2),  # u[y, x-1]
        (0, 1): jnp.concatenate([u[:, :, 2:], zcol], axis=2),         # u[y, x+1]
    }
    for k in range(NUM_K):
        acc = None
        for (oy, ox), wv in win.items():
            w = float(FILTERS[k, oy + 1, ox + 1])
            if w == 0.0:
                continue
            term = wv if w == 1.0 else w * wv
            acc = term if acc is None else acc + term
        # Full (H, 2W) plane per (b, k): dense stores over the output tiling.
        o_ref[:, k, :, :] = acc


def conv_fixed_kernels(u):
    # u: (B, H, W, 2) -> (B, K, H, W, 2); only free reshapes around the kernel.
    B, H, W, _ = u.shape
    W2 = 2 * W
    vmem_limit, budget, min_steps = _tpu_budgets()
    u2 = u.reshape(B, H, W2)
    TB = _pick_conv_batch(B, H, W2, budget, min_steps)
    out = pl.pallas_call(
        _conv_kernel,
        out_shape=jax.ShapeDtypeStruct((B, NUM_K, H, W2), jnp.float32),
        grid=(B // TB,),
        in_specs=[pl.BlockSpec((TB, H, W2), lambda b: (b, 0, 0))],
        out_specs=pl.BlockSpec((TB, NUM_K, H, W2), lambda b: (b, 0, 0, 0)),
        compiler_params=pltpu.CompilerParams(
            dimension_semantics=("parallel",),
            vmem_limit_bytes=vmem_limit),
    )(u2)
    return out.reshape(B, NUM_K, H, W, 2)


# ----------------------------------------------------------------------------
# Pallas kernel 2: complex multiply of f with the FFT filter bank, done on the
# native interleaved layout.
#   f_ref  : (1, TC, L)   interleaved re/im along the lane axis
#   ka_ref : (K, L)       [kr, kr, ...]
#   kb_ref : (K, L)       [-ki, +ki, ...]
#   o_ref  : (1, K, TC, L) written straight into the final (B,K,C,H*W*2) layout.
# out[2j]   = kr*re - ki*im       out[2j+1] = kr*im + ki*re
# realised as  ka*f + kb*swap_pairs(f)  with one even/odd lane swap.
# ----------------------------------------------------------------------------
def _fftmul_kernel(f_ref, ka_ref, kb_ref, o_ref):
    f = f_ref[0, :, :]                                   # (TC, L)
    TC, L = f.shape
    zc = jnp.zeros((TC, 1), f.dtype)
    shift_l = jnp.concatenate([f[:, 1:], zc], axis=1)    # f[j+1]
    shift_r = jnp.concatenate([zc, f[:, : L - 1]], axis=1)  # f[j-1]
    lane = lax.broadcasted_iota(jnp.int32, f.shape, 1)
    f_swap = jnp.where(lane % 2 == 0, shift_l, shift_r)  # pairwise re/im swap
    for k in range(NUM_K):
        # Full (TC, L) lane-dense slab per filter (no per-sublane scatter).
        o_ref[0, k, :, :] = ka_ref[k:k + 1, :] * f + kb_ref[k:k + 1, :] * f_swap


def fft_multiply(f, ka, kb):
    # f: (B, C, H, W, 2) -> (B, K, C, H, W, 2); only free reshapes around the kernel.
    B, C, H, W, _ = f.shape
    HW2 = 2 * H * W
    vmem_limit, budget, min_steps = _tpu_budgets()
    f2 = f.reshape(B, C, HW2)
    TC, L = _pick_fft_tiles(B, C, HW2, budget, min_steps)
    out = pl.pallas_call(
        _fftmul_kernel,
        out_shape=jax.ShapeDtypeStruct((B, NUM_K, C, HW2), jnp.float32),
        # HW axis outermost: the filter blocks keep the same block index across
        # the whole inner (B, C) sweep, so their DMA is not re-issued.
        grid=(HW2 // L, B, C // TC),
        in_specs=[
            pl.BlockSpec((1, TC, L), lambda h, b, c: (b, c, h)),
            pl.BlockSpec((NUM_K, L), lambda h, b, c: (0, h)),
            pl.BlockSpec((NUM_K, L), lambda h, b, c: (0, h)),
        ],
        out_specs=pl.BlockSpec((1, NUM_K, TC, L), lambda h, b, c: (b, 0, c, h)),
        compiler_params=pltpu.CompilerParams(
            dimension_semantics=("parallel", "parallel", "parallel"),
            vmem_limit_bytes=vmem_limit),
    )(f2, ka, kb)
    return out.reshape(B, NUM_K, C, H, W, 2)


# ----------------------------------------------------------------------------
# Forward pass equivalent to FixedKernels.forward
# ----------------------------------------------------------------------------
@jax.jit
def _forward_arrays(u, f, ka, kb):
    return conv_fixed_kernels(u), fft_multiply(f, ka, kb)


def fixed_kernels_forward(inputs, image_size):
    ka, kb = get_fft_filters(image_size)       # cached per image_size (host FFT)
    out_u, out_f = _forward_arrays(inputs["u_t"], inputs["f"], ka, kb)
    return {
        "u_t": out_u,                                   # (B, K, H, W, 2)
        "f": out_f,                                     # (B, K, C, H, W, 2)
        "coil_sens": inputs["coil_sens"][:, None],      # (B, 1, C, H, W, 2)
        "sampling_mask": inputs["sampling_mask"][:, None],  # (B, 1, H, W)
        "kernel": jnp.asarray(FILTERS),
    }


# ----------------------------------------------------------------------------
# Pure-JAX/numpy reference (sanity check, independent of the kernel packing)
# ----------------------------------------------------------------------------
def _ref_forward(inputs, image_size):
    u = inputs["u_t"]
    f = inputs["f"]
    B, H, W, _ = u.shape
    up = jnp.pad(u, ((0, 0), (1, 1), (1, 1), (0, 0)))
    out_u = []
    for k in range(NUM_K):
        acc = jnp.zeros((B, H, W, 2), jnp.float32)
        for dy in range(3):
            for dx in range(3):
                w = float(FILTERS[k, dy, dx])
                if w != 0.0:
                    acc = acc + w * up[:, dy:dy + H, dx:dx + W, :]
        out_u.append(acc)
    out_u = jnp.stack(out_u, axis=1)

    kre, kim = _fft_re_im(H, W)
    kk = jnp.asarray(kre.reshape(NUM_K, H, W)) + 1j * jnp.asarray(kim.reshape(NUM_K, H, W))
    fc = f[..., 0] + 1j * f[..., 1]                       # (B, C, H, W)
    prod = kk[None, :, None] * fc[:, None]                # (B, K, C, H, W)
    out_f = jnp.stack([jnp.real(prod), jnp.imag(prod)], axis=-1).astype(jnp.float32)
    return out_u, out_f


if __name__ == "__main__":
    B, C, H, W = 2, 4, 16, 16
    image_size = (W, H)

    key = jax.random.PRNGKey(0)
    k1, k2, k3, k4 = jax.random.split(key, 4)
    inputs = {
        "u_t": jax.random.normal(k1, (B, H, W, 2), jnp.float32),
        "f": jax.random.normal(k2, (B, C, H, W, 2), jnp.float32),
        "coil_sens": jax.random.normal(k3, (B, C, H, W, 2), jnp.float32),
        "sampling_mask": (jax.random.uniform(k4, (B, H, W)) > 0.5).astype(jnp.float32),
    }

    out = fixed_kernels_forward(inputs, image_size)
    jax.block_until_ready(out["u_t"])
    jax.block_until_ready(out["f"])

    ref_u, ref_f = _ref_forward(inputs, image_size)
    assert out["u_t"].shape == (B, NUM_K, H, W, 2)
    assert out["f"].shape == (B, NUM_K, C, H, W, 2)
    assert out["coil_sens"].shape == (B, 1, C, H, W, 2)
    assert out["sampling_mask"].shape == (B, 1, H, W)
    np.testing.assert_allclose(np.asarray(out["u_t"]), np.asarray(ref_u), rtol=1e-5, atol=1e-5)
    np.testing.assert_allclose(np.asarray(out["f"]), np.asarray(ref_f), rtol=1e-5, atol=1e-5)

    print("KERNEL_OK")
</pallas_src>

<mosaic_0001>
module attributes {stable_mosaic.version = 11 : i64} {
  func.func @_fftmul_kernel(%arg0: i32, %arg1: i32, %arg2: i32, %arg3: memref<1x4x512xf32, #tpu.memory_space<vmem>>, %arg4: memref<4x512xf32, #tpu.memory_space<vmem>>, %arg5: memref<4x512xf32, #tpu.memory_space<vmem>>, %arg6: memref<1x4x4x512xf32, #tpu.memory_space<vmem>>) attributes {dimension_semantics = [#tpu.dimension_semantics<parallel>, #tpu.dimension_semantics<parallel>, #tpu.dimension_semantics<parallel>], iteration_bounds = array<i64: 1, 2, 1>, scalar_prefetch = 0 : i64, scratch_operands = 0 : i64, tpu.core_type = #tpu.core_type<tc>, window_params = [{transform_indices = @transform_0, window_bounds = array<i64: 1, 4, 512>}, {transform_indices = @transform_1, window_bounds = array<i64: 4, 512>}, {transform_indices = @transform_2, window_bounds = array<i64: 4, 512>}, {transform_indices = @transform_3, window_bounds = array<i64: 1, 4, 4, 512>}]} {
    %c0 = arith.constant 0 : index
    %c0_0 = arith.constant 0 : index
    %c0_1 = arith.constant 0 : index
    %0 = vector.load %arg3[%c0, %c0_0, %c0_1] : memref<1x4x512xf32, #tpu.memory_space<vmem>>, vector<1x4x512xf32>
    %1 = vector.shape_cast %0 : vector<1x4x512xf32> to vector<4x512xf32>
    %cst = arith.constant 0.000000e+00 : f32
    %2 = vector.broadcast %cst : f32 to vector<4x1xf32>
    %3 = vector.extract_strided_slice %1 {offsets = [0, 1], sizes = [4, 511], strides = [1, 1]} : vector<4x512xf32> to vector<4x511xf32>
    %4 = tpu.concatenate %3, %2 in 1 : vector<4x511xf32>, vector<4x1xf32> -> vector<4x512xf32>
    %5 = vector.extract_strided_slice %1 {offsets = [0, 0], sizes = [4, 511], strides = [1, 1]} : vector<4x512xf32> to vector<4x511xf32>
    %6 = tpu.concatenate %2, %5 in 1 : vector<4x1xf32>, vector<4x511xf32> -> vector<4x512xf32>
    %7 = tpu.iota {dimensions = array<i32: 1>} : vector<4x512xi32>
    %c2_i32 = arith.constant 2 : i32
    %c0_i32 = arith.constant 0 : i32
    %8 = arith.cmpi eq, %c2_i32, %c0_i32 : i32
    %c1_i32 = arith.constant 1 : i32
    %9 = arith.select %8, %c1_i32, %c2_i32 : i32
    %10 = vector.broadcast %9 : i32 to vector<4x512xi32>
    %11 = arith.remsi %7, %10 : vector<4x512xi32>
    %c0_i32_2 = arith.constant 0 : i32
    %12 = vector.broadcast %c0_i32_2 : i32 to vector<4x512xi32>
    %13 = arith.cmpi ne, %11, %12 : vector<4x512xi32>
    %c0_i32_3 = arith.constant 0 : i32
    %14 = vector.broadcast %c0_i32_3 : i32 to vector<4x512xi32>
    %15 = arith.cmpi slt, %11, %14 : vector<4x512xi32>
    %c0_i32_4 = arith.constant 0 : i32
    %16 = arith.cmpi slt, %9, %c0_i32_4 : i32
    %17 = vector.broadcast %16 : i1 to vector<4x512xi1>
    %18 = vector.broadcast %17 : vector<4x512xi1> to vector<4x512xi1>
    %19 = arith.xori %15, %18 : vector<4x512xi1>
    %20 = arith.andi %19, %13 : vector<4x512xi1>
    %21 = vector.broadcast %9 : i32 to vector<4x512xi32>
    %22 = arith.addi %11, %21 : vector<4x512xi32>
    %23 = arith.select %20, %22, %11 : vector<4x512xi1>, vector<4x512xi32>
    %c0_i32_5 = arith.constant 0 : i32
    %24 = vector.broadcast %c0_i32_5 : i32 to vector<4x512xi32>
    %25 = arith.cmpi eq, %23, %24 : vector<4x512xi32>
    %26 = arith.select %25, %4, %6 : vector<4x512xi1>, vector<4x512xf32>
    %c0_6 = arith.constant 0 : index
    %c0_7 = arith.constant 0 : index
    %27 = vector.load %arg4[%c0_6, %c0_7] : memref<4x512xf32, #tpu.memory_space<vmem>>, vector<1x512xf32>
    %28 = vector.broadcast %27 : vector<1x512xf32> to vector<4x512xf32>
    %29 = arith.mulf %28, %1 : vector<4x512xf32>
    %c0_8 = arith.constant 0 : index
    %c0_9 = arith.constant 0 : index
    %30 = vector.load %arg5[%c0_8, %c0_9] : memref<4x512xf32, #tpu.memory_space<vmem>>, vector<1x512xf32>
    %31 = vector.broadcast %30 : vector<1x512xf32> to vector<4x512xf32>
    %32 = arith.mulf %31, %26 : vector<4x512xf32>
    %33 = arith.addf %29, %32 : vector<4x512xf32>
    %c0_10 = arith.constant 0 : index
    %c0_11 = arith.constant 0 : index
    %c0_12 = arith.constant 0 : index
    %c0_13 = arith.constant 0 : index
    %34 = vector.load %arg6[%c0_10, %c0_11, %c0_12, %c0_13] : memref<1x4x4x512xf32, #tpu.memory_space<vmem>>, vector<1x1x4x512xf32>
    %35 = vector.shape_cast %34 : vector<1x1x4x512xf32> to vector<4x512xf32>
    %36 = vector.shape_cast %33 : vector<4x512xf32> to vector<1x1x4x512xf32>
    tpu.vector_store %arg6[%c0_10, %c0_11, %c0_12, %c0_13], %36 {strides = array<i32>} : memref<1x4x4x512xf32, #tpu.memory_space<vmem>>, vector<1x1x4x512xf32>,
    %c1 = arith.constant 1 : index
    %c0_14 = arith.constant 0 : index
    %37 = vector.load %arg4[%c1, %c0_14] : memref<4x512xf32, #tpu.memory_space<vmem>>, vector<1x512xf32>
    %38 = vector.broadcast %37 : vector<1x512xf32> to vector<4x512xf32>
    %39 = arith.mulf %38, %1 : vector<4x512xf32>
    %c1_15 = arith.constant 1 : index
    %c0_16 = arith.constant 0 : index
    %40 = vector.load %arg5[%c1_15, %c0_16] : memref<4x512xf32, #tpu.memory_space<vmem>>, vector<1x512xf32>
    %41 = vector.broadcast %40 : vector<1x512xf32> to vector<4x512xf32>
    %42 = arith.mulf %41, %26 : vector<4x512xf32>
    %43 = arith.addf %39, %42 : vector<4x512xf32>
    %c0_17 = arith.constant 0 : index
    %c1_18 = arith.constant 1 : index
    %c0_19 = arith.constant 0 : index
    %c0_20 = arith.constant 0 : index
    %44 = vector.load %arg6[%c0_17, %c1_18, %c0_19, %c0_20] : memref<1x4x4x512xf32, #tpu.memory_space<vmem>>, vector<1x1x4x512xf32>
    %45 = vector.shape_cast %44 : vector<1x1x4x512xf32> to vector<4x512xf32>
    %46 = vector.shape_cast %43 : vector<4x512xf32> to vector<1x1x4x512xf32>
    tpu.vector_store %arg6[%c0_17, %c1_18, %c0_19, %c0_20], %46 {strides = array<i32>} : memref<1x4x4x512xf32, #tpu.memory_space<vmem>>, vector<1x1x4x512xf32>,
    %c2 = arith.constant 2 : index
    %c0_21 = arith.constant 0 : index
    %47 = vector.load %arg4[%c2, %c0_21] : memref<4x512xf32, #tpu.memory_space<vmem>>, vector<1x512xf32>
    %48 = vector.broadcast %47 : vector<1x512xf32> to vector<4x512xf32>
    %49 = arith.mulf %48, %1 : vector<4x512xf32>
    %c2_22 = arith.constant 2 : index
    %c0_23 = arith.constant 0 : index
    %50 = vector.load %arg5[%c2_22, %c0_23] : memref<4x512xf32, #tpu.memory_space<vmem>>, vector<1x512xf32>
    %51 = vector.broadcast %50 : vector<1x512xf32> to vector<4x512xf32>
    %52 = arith.mulf %51, %26 : vector<4x512xf32>
    %53 = arith.addf %49, %52 : vector<4x512xf32>
    %c0_24 = arith.constant 0 : index
    %c2_25 = arith.constant 2 : index
    %c0_26 = arith.constant 0 : index
    %c0_27 = arith.constant 0 : index
    %54 = vector.load %arg6[%c0_24, %c2_25, %c0_26, %c0_27] : memref<1x4x4x512xf32, #tpu.memory_space<vmem>>, vector<1x1x4x512xf32>
    %55 = vector.shape_cast %54 : vector<1x1x4x512xf32> to vector<4x512xf32>
    %56 = vector.shape_cast %53 : vector<4x512xf32> to vector<1x1x4x512xf32>
    tpu.vector_store %arg6[%c0_24, %c2_25, %c0_26, %c0_27], %56 {strides = array<i32>} : memref<1x4x4x512xf32, #tpu.memory_space<vmem>>, vector<1x1x4x512xf32>,
    %c3 = arith.constant 3 : index
    %c0_28 = arith.constant 0 : index
    %57 = vector.load %arg4[%c3, %c0_28] : memref<4x512xf32, #tpu.memory_space<vmem>>, vector<1x512xf32>
    %58 = vector.broadcast %57 : vector<1x512xf32> to vector<4x512xf32>
    %59 = arith.mulf %58, %1 : vector<4x512xf32>
    %c3_29 = arith.constant 3 : index
    %c0_30 = arith.constant 0 : index
    %60 = vector.load %arg5[%c3_29, %c0_30] : memref<4x512xf32, #tpu.memory_space<vmem>>, vector<1x512xf32>
    %61 = vector.broadcast %60 : vector<1x512xf32> to vector<4x512xf32>
    %62 = arith.mulf %61, %26 : vector<4x512xf32>
    %63 = arith.addf %59, %62 : vector<4x512xf32>
    %c0_31 = arith.constant 0 : index
    %c3_32 = arith.constant 3 : index
    %c0_33 = arith.constant 0 : index
    %c0_34 = arith.constant 0 : index
    %64 = vector.load %arg6[%c0_31, %c3_32, %c0_33, %c0_34] : memref<1x4x4x512xf32, #tpu.memory_space<vmem>>, vector<1x1x4x512xf32>
    %65 = vector.shape_cast %64 : vector<1x1x4x512xf32> to vector<4x512xf32>
    %66 = vector.shape_cast %63 : vector<4x512xf32> to vector<1x1x4x512xf32>
    tpu.vector_store %arg6[%c0_31, %c3_32, %c0_33, %c0_34], %66 {strides = array<i32>} : memref<1x4x4x512xf32, #tpu.memory_space<vmem>>, vector<1x1x4x512xf32>,
    return
  }
  func.func @transform_0(%arg0: i32, %arg1: i32, %arg2: i32) -> (i32, i32, i32) {
    %c0_i32 = arith.constant 0 : i32
    return %arg1, %arg2, %arg0 : i32, i32, i32
  }
  func.func @transform_1(%arg0: i32, %arg1: i32, %arg2: i32) -> (i32, i32) {
    %c0_i32 = arith.constant 0 : i32
    %c0_i32_0 = arith.constant 0 : i32
    return %c0_i32, %arg0 : i32, i32
  }
  func.func @transform_2(%arg0: i32, %arg1: i32, %arg2: i32) -> (i32, i32) {
    %c0_i32 = arith.constant 0 : i32
    %c0_i32_0 = arith.constant 0 : i32
    return %c0_i32, %arg0 : i32, i32
  }
  func.func @transform_3(%arg0: i32, %arg1: i32, %arg2: i32) -> (i32, i32, i32, i32) {
    %c0_i32 = arith.constant 0 : i32
    %c0_i32_0 = arith.constant 0 : i32
    return %arg1, %c0_i32, %arg2, %arg0 : i32, i32, i32, i32
  }
}

module attributes {stable_mosaic.version = 11 : i64} {
  func.func @_conv_kernel(%arg0: i32, %arg1: memref<1x16x32xf32, #tpu.memory_space<vmem>>, %arg2: memref<1x4x16x32xf32, #tpu.memory_space<vmem>>) attributes {dimension_semantics = [#tpu.dimension_semantics<parallel>], iteration_bounds = array<i64: 2>, scalar_prefetch = 0 : i64, scratch_operands = 0 : i64, tpu.core_type = #tpu.core_type<tc>, window_params = [{transform_indices = @transform_0, window_bounds = array<i64: 1, 16, 32>}, {transform_indices = @transform_1, window_bounds = array<i64: 1, 4, 16, 32>}]} {
    %c0 = arith.constant 0 : index
    %c0_0 = arith.constant 0 : index
    %c0_1 = arith.constant 0 : index
    %0 = vector.load %arg1[%c0, %c0_0, %c0_1] : memref<1x16x32xf32, #tpu.memory_space<vmem>>, vector<1x16x32xf32>
    %cst = arith.constant 0.000000e+00 : f32
    %1 = vector.broadcast %cst : f32 to vector<1x1x32xf32>
    %cst_2 = arith.constant 0.000000e+00 : f32
    %2 = vector.broadcast %cst_2 : f32 to vector<1x16x2xf32>
    %3 = vector.extract_strided_slice %0 {offsets = [0, 0, 0], sizes = [1, 15, 32], strides = [1, 1, 1]} : vector<1x16x32xf32> to vector<1x15x32xf32>
    %4 = tpu.concatenate %1, %3 in 1 : vector<1x1x32xf32>, vector<1x15x32xf32> -> vector<1x16x32xf32>
    %5 = vector.extract_strided_slice %0 {offsets = [0, 1, 0], sizes = [1, 15, 32], strides = [1, 1, 1]} : vector<1x16x32xf32> to vector<1x15x32xf32>
    %6 = tpu.concatenate %5, %1 in 1 : vector<1x15x32xf32>, vector<1x1x32xf32> -> vector<1x16x32xf32>
    %7 = vector.extract_strided_slice %0 {offsets = [0, 0, 0], sizes = [1, 16, 30], strides = [1, 1, 1]} : vector<1x16x32xf32> to vector<1x16x30xf32>
    %8 = tpu.concatenate %2, %7 in 2 : vector<1x16x2xf32>, vector<1x16x30xf32> -> vector<1x16x32xf32>
    %9 = vector.extract_strided_slice %0 {offsets = [0, 0, 2], sizes = [1, 16, 30], strides = [1, 1, 1]} : vector<1x16x32xf32> to vector<1x16x30xf32>
    %10 = tpu.concatenate %9, %2 in 2 : vector<1x16x30xf32>, vector<1x16x2xf32> -> vector<1x16x32xf32>
    %c0_3 = arith.constant 0 : index
    %c0_4 = arith.constant 0 : index
    %c0_5 = arith.constant 0 : index
    %c0_6 = arith.constant 0 : index
    %11 = vector.load %arg2[%c0_3, %c0_4, %c0_5, %c0_6] : memref<1x4x16x32xf32, #tpu.memory_space<vmem>>, vector<1x1x16x32xf32>
    %12 = vector.shape_cast %11 : vector<1x1x16x32xf32> to vector<1x16x32xf32>
    %13 = vector.shape_cast %0 : vector<1x16x32xf32> to vector<1x1x16x32xf32>
    tpu.vector_store %arg2[%c0_3, %c0_4, %c0_5, %c0_6], %13 {strides = array<i32>} : memref<1x4x16x32xf32, #tpu.memory_space<vmem>>, vector<1x1x16x32xf32>,
    %cst_7 = arith.constant -1.000000e+00 : f32
    %14 = vector.broadcast %cst_7 : f32 to vector<1x16x32xf32>
    %15 = arith.mulf %14, %0 : vector<1x16x32xf32>
    %16 = arith.addf %15, %10 : vector<1x16x32xf32>
    %c0_8 = arith.constant 0 : index
    %c1 = arith.constant 1 : index
    %c0_9 = arith.constant 0 : index
    %c0_10 = arith.constant 0 : index
    %17 = vector.load %arg2[%c0_8, %c1, %c0_9, %c0_10] : memref<1x4x16x32xf32, #tpu.memory_space<vmem>>, vector<1x1x16x32xf32>
    %18 = vector.shape_cast %17 : vector<1x1x16x32xf32> to vector<1x16x32xf32>
    %19 = vector.shape_cast %16 : vector<1x16x32xf32> to vector<1x1x16x32xf32>
    tpu.vector_store %arg2[%c0_8, %c1, %c0_9, %c0_10], %19 {strides = array<i32>} : memref<1x4x16x32xf32, #tpu.memory_space<vmem>>, vector<1x1x16x32xf32>,
    %cst_11 = arith.constant 5.000000e+00 : f32
    %20 = vector.broadcast %cst_11 : f32 to vector<1x16x32xf32>
    %21 = arith.mulf %20, %0 : vector<1x16x32xf32>
    %cst_12 = arith.constant -1.000000e+00 : f32
    %22 = vector.broadcast %cst_12 : f32 to vector<1x16x32xf32>
    %23 = arith.mulf %22, %4 : vector<1x16x32xf32>
    %24 = arith.addf %21, %23 : vector<1x16x32xf32>
    %cst_13 = arith.constant -1.000000e+00 : f32
    %25 = vector.broadcast %cst_13 : f32 to vector<1x16x32xf32>
    %26 = arith.mulf %25, %6 : vector<1x16x32xf32>
    %27 = arith.addf %24, %26 : vector<1x16x32xf32>
    %cst_14 = arith.constant -1.000000e+00 : f32
    %28 = vector.broadcast %cst_14 : f32 to vector<1x16x32xf32>
    %29 = arith.mulf %28, %8 : vector<1x16x32xf32>
    %30 = arith.addf %27, %29 : vector<1x16x32xf32>
    %cst_15 = arith.constant -1.000000e+00 : f32
    %31 = vector.broadcast %cst_15 : f32 to vector<1x16x32xf32>
    %32 = arith.mulf %31, %10 : vector<1x16x32xf32>
    %33 = arith.addf %30, %32 : vector<1x16x32xf32>
    %c0_16 = arith.constant 0 : index
    %c2 = arith.constant 2 : index
    %c0_17 = arith.constant 0 : index
    %c0_18 = arith.constant 0 : index
    %34 = vector.load %arg2[%c0_16, %c2, %c0_17, %c0_18] : memref<1x4x16x32xf32, #tpu.memory_space<vmem>>, vector<1x1x16x32xf32>
    %35 = vector.shape_cast %34 : vector<1x1x16x32xf32> to vector<1x16x32xf32>
    %36 = vector.shape_cast %33 : vector<1x16x32xf32> to vector<1x1x16x32xf32>
    tpu.vector_store %arg2[%c0_16, %c2, %c0_17, %c0_18], %36 {strides = array<i32>} : memref<1x4x16x32xf32, #tpu.memory_space<vmem>>, vector<1x1x16x32xf32>,
    %cst_19 = arith.constant -4.000000e+00 : f32
    %37 = vector.broadcast %cst_19 : f32 to vector<1x16x32xf32>
    %38 = arith.mulf %37, %0 : vector<1x16x32xf32>
    %39 = arith.addf %38, %4 : vector<1x16x32xf32>
    %40 = arith.addf %39, %6 : vector<1x16x32xf32>
    %41 = arith.addf %40, %8 : vector<1x16x32xf32>
    %42 = arith.addf %41, %10 : vector<1x16x32xf32>
    %c0_20 = arith.constant 0 : index
    %c3 = arith.constant 3 : index
    %c0_21 = arith.constant 0 : index
    %c0_22 = arith.constant 0 : index
    %43 = vector.load %arg2[%c0_20, %c3, %c0_21, %c0_22] : memref<1x4x16x32xf32, #tpu.memory_space<vmem>>, vector<1x1x16x32xf32>
    %44 = vector.shape_cast %43 : vector<1x1x16x32xf32> to vector<1x16x32xf32>
    %45 = vector.shape_cast %42 : vector<1x16x32xf32> to vector<1x1x16x32xf32>
    tpu.vector_store %arg2[%c0_20, %c3, %c0_21, %c0_22], %45 {strides = array<i32>} : memref<1x4x16x32xf32, #tpu.memory_space<vmem>>, vector<1x1x16x32xf32>,
    return
  }
  func.func @transform_0(%arg0: i32) -> (i32, i32, i32) {
    %c0_i32 = arith.constant 0 : i32
    %c0_i32_0 = arith.constant 0 : i32
    %c0_i32_1 = arith.constant 0 : i32
    return %arg0, %c0_i32, %c0_i32_0 : i32, i32, i32
  }
  func.func @transform_1(%arg0: i32) -> (i32, i32, i32, i32) {
    %c0_i32 = arith.constant 0 : i32
    %c0_i32_0 = arith.constant 0 : i32
    %c0_i32_1 = arith.constant 0 : i32
    %c0_i32_2 = arith.constant 0 : i32
    return %arg0, %c0_i32, %c0_i32_0, %c0_i32_1 : i32, i32, i32, i32
  }
}

</mosaic_0001>

<llo_original>
// kernel: _forward_arrays.3
$region0: #{_forward_arrays.3}
  #allocation0 [shape = 'u32[]', space=smem, size = 0x4, offset = 0x4, fixed_abs, tag = 'smem constant byte address 0x4 - core index']
  #allocation1 [shape = 'u32[72,128]{1,0:T(1,128)}', space=vmem, size = 0x9000, scoped, tag = 'internal scratch']
  %s0 = inlined_call_operand.vmem [shape: f32[2,4,512], index: 0, kind: input, shape index: {}]
  %s1 = inlined_call_operand.hbm [shape: f32[4,512], index: 1, kind: input, shape index: {}]
  %s2 = inlined_call_operand.hbm [shape: f32[4,512], index: 2, kind: input, shape index: {}]
  %s3 = inlined_call_operand.vmem [shape: f32[2,4,4,512], index: 3, kind: output, shape index: {}]
  %s4 = sld [smem:[#allocation0]]
  $region53: #{_forward_arrays.3} parent=0
    _
  %s6 = ssub.s32 1, %s4
  %s7 = scalar_select 0, %s6, %s4
  $region1: #{_forward_arrays.3} parent=0
    #allocation2 [shape = 'u8[8192]{0}', space=vmem, size = 0x2000, scoped, tag = 'input window, operand 1, single buffered']
    #allocation3 [shape = 's32[2]{0}', space=sflag, size = 0x8, scoped, tag = 'scoped memory for _forward_arrays.3']
    #allocation4 [shape = 'u8[8192]{0}', space=vmem, size = 0x2000, scoped, tag = 'input window, operand 2, single buffered']
    #allocation5 [shape = 's32[1]{0}', space=sflag, size = 0x4, scoped, tag = 'scoped memory for _forward_arrays.3']
    %8 = vsyncpa [#allocation3], 0
    %9 = vsyncpa [#allocation5], 0
    loop: start=0, step=1, limit=4
    $region2: #{_forward_arrays.3} parent=1 // loop_pre_header
      _
    $region3: #{_forward_arrays.3} parent=1 // loop_header
      %s11 = sphi 0, %s15
      %p12 = scmp.ge.s32.totalorder %s11, 4
      %s18 = sphi 0, %s37
      %s19 = sphi 0, %s33
      %s20 = sphi 0, %s29
      %s21 = sphi 0, %s18
      %s22 = sphi 0, %s19
      %s23 = sphi 0, %s20
      %s24 = sphi 0, %s21
      %s25 = sphi 0, %s22
      %s26 = sphi 0, %s23
      %s44 = sphi 0, %s46
      %s47 = sphi 0, %s44
      %s48 = sphi 0, %s47
      %s64 = sphi 0, %s48
      %s70 = sphi 0, %s72
      %s73 = sphi 0, %s70
      %s74 = sphi 0, %s73
      %s90 = sphi 0, %s74
      %s96 = sphi 0, %s98
      %s99 = sphi 0, %s96
      %s100 = sphi 0, %s99
      %s116 = sphi 0, %s100
      %s126 = sphi 0, %s128
      %s129 = sphi 0, %s126
      %s130 = sphi 0, %s129
      %s146 = sphi 0, %s130
    $region4: #{_forward_arrays.3} parent=1 // loop_header_branch
      %14 = sbr.rel (%p12) target = $region8
    $region5: #{_forward_arrays.3} parent=1 // loop_body
      %s16 = ssub.s32 %s11, 1
      %s17 = ssub.s32 %s11, 2
      %s27 = sadd.s32 1, %s20
      %p28 = scmp.ge.s32.totalorder %s27, 1
      %s29 = scalar_select %p28, 0, %s27
      %s30 = sadd.s32 1, %s19
      %s31 = scalar_select %p28, %s30, %s19
      %p32 = scmp.ge.s32.totalorder %s31, 2
      %s33 = scalar_select %p32, 0, %s31
      %s34 = sadd.s32 1, %s18
      %s35 = scalar_select %p32, %s34, %s18
      %p36 = scmp.ge.s32.totalorder %s35, 1
      %s37 = scalar_select %p36, 0, %s35
      %s38 = ssub.s32 %s19, %s33
      %s39 = ssub.s32 %s20, %s29
      %s40 = sor.u32 %s38, %s39
      %s41 = ssub.s32 %s18, %s37
      %s42 = sor.u32 %s40, %s41
      %p43 = scmp.eq.s32.totalorder %s42, 0
      %s45 = sadd.s32 %s44, 1
      %s46 = scalar_select %p43, %s44, %s45
      %p49 = pneg %p43
      %p50 = scmp.eq.s32.totalorder %s11, 1
      %p51 = por %p49, %p50
      %p52 = scmp.ne.s32.totalorder %s44, %s47
      %p53 = scmp.eq.s32.totalorder %s11, 0
      %p54 = por %p52, %p53
      %p55 = scmp.ne.s32.totalorder %s44, %s47
      %p56 = scmp.eq.s32.totalorder %s16, 1
      %p57 = por %p55, %p56
      %p58 = scmp.ne.s32.totalorder %s47, %s48
      %p59 = scmp.eq.s32.totalorder %s16, 0
      %p60 = por %p58, %p59
      %p61 = scmp.ne.s32.totalorder %s47, %s48
      %p62 = scmp.eq.s32.totalorder %s17, 1
      %p63 = por %p61, %p62
      %p65 = scmp.ne.s32.totalorder %s48, %s64
      %p66 = scmp.eq.s32.totalorder %s17, 0
      %p67 = por %p65, %p66
      %s68 = ssub.s32 %s18, %s37
      %p69 = scmp.eq.s32.totalorder %s68, 0
      %s71 = sadd.s32 %s70, 1
      %s72 = scalar_select %p69, %s70, %s71
      %p75 = pneg %p69
      %p76 = scmp.eq.s32.totalorder %s11, 1
      %p77 = por %p75, %p76
      %p78 = scmp.ne.s32.totalorder %s70, %s73
      %p79 = scmp.eq.s32.totalorder %s11, 0
      %p80 = por %p78, %p79
      %p81 = scmp.ne.s32.totalorder %s70, %s73
      %p82 = scmp.eq.s32.totalorder %s16, 1
      %p83 = por %p81, %p82
      %p84 = scmp.ne.s32.totalorder %s73, %s74
      %p85 = scmp.eq.s32.totalorder %s16, 0
      %p86 = por %p84, %p85
      %p87 = scmp.ne.s32.totalorder %s73, %s74
      %p88 = scmp.eq.s32.totalorder %s17, 1
      %p89 = por %p87, %p88
      %p91 = scmp.ne.s32.totalorder %s74, %s90
      %p92 = scmp.eq.s32.totalorder %s17, 0
      %p93 = por %p91, %p92
      %s94 = ssub.s32 %s18, %s37
      %p95 = scmp.eq.s32.totalorder %s94, 0
      %s97 = sadd.s32 %s96, 1
      %s98 = scalar_select %p95, %s96, %s97
      %p101 = pneg %p95
      %p102 = scmp.eq.s32.totalorder %s11, 1
      %p103 = por %p101, %p102
      %p104 = scmp.ne.s32.totalorder %s96, %s99
      %p105 = scmp.eq.s32.totalorder %s11, 0
      %p106 = por %p104, %p105
      %p107 = scmp.ne.s32.totalorder %s96, %s99
      %p108 = scmp.eq.s32.totalorder %s16, 1
      %p109 = por %p107, %p108
      %p110 = scmp.ne.s32.totalorder %s99, %s100
      %p111 = scmp.eq.s32.totalorder %s16, 0
      %p112 = por %p110, %p111
      %p113 = scmp.ne.s32.totalorder %s99, %s100
      %p114 = scmp.eq.s32.totalorder %s17, 1
      %p115 = por %p113, %p114
      %p117 = scmp.ne.s32.totalorder %s100, %s116
      %p118 = scmp.eq.s32.totalorder %s17, 0
      %p119 = por %p117, %p118
      %s120 = ssub.s32 %s19, %s33
      %s121 = ssub.s32 %s20, %s29
      %s122 = sor.u32 %s120, %s121
      %s123 = ssub.s32 %s18, %s37
      %s124 = sor.u32 %s122, %s123
      %p125 = scmp.eq.s32.totalorder %s124, 0
      %s127 = sadd.s32 %s126, 1
      %s128 = scalar_select %p125, %s126, %s127
      %p131 = pneg %p125
      %p132 = scmp.eq.s32.totalorder %s11, 1
      %p133 = por %p131, %p132
      %p134 = scmp.ne.s32.totalorder %s126, %s129
      %p135 = scmp.eq.s32.totalorder %s11, 0
      %p136 = por %p134, %p135
      %p137 = scmp.ne.s32.totalorder %s126, %s129
      %p138 = scmp.eq.s32.totalorder %s16, 1
      %p139 = por %p137, %p138
      %p140 = scmp.ne.s32.totalorder %s129, %s130
      %p141 = scmp.eq.s32.totalorder %s16, 0
      %p142 = por %p140, %p141
      %p143 = scmp.ne.s32.totalorder %s129, %s130
      %p144 = scmp.eq.s32.totalorder %s17, 1
      %p145 = por %p143, %p144
      %p147 = scmp.ne.s32.totalorder %s130, %s146
      %p148 = scmp.eq.s32.totalorder %s17, 0
      %p149 = por %p147, %p148
      %p150 = scmp.le.s32.totalorder 1, %s11
      %p151 = scmp.lt.s32.totalorder %s11, 3
      %p152 = pnand %p150, %p151
      %p153 = pneg %p152
      // Predicated region
      $region9: #{_forward_arrays.3} parent=5 // pred_check
        _
      $region10: #{_forward_arrays.3} parent=5 // pred_check_branch
        %155 = sbr.rel (%p152) target = $region12
      $region11: #{_forward_arrays.3} parent=5 // pred_region
        %s156 = ssub.s32 %s11, 1
        // Predicated region
        $region13: #{_forward_arrays.3} parent=11 // pred_check
          %p157 = pneg %p86
        $region14: #{_forward_arrays.3} parent=11 // pred_check_branch
          %159 = sbr.rel (%p157) target = $region16
        $region15: #{_forward_arrays.3} parent=11 // pred_region
          %s160 = smul.u32 4, %s21
          %162 = vsyncadd [#allocation3], 0
          %s163 = smul.addr %s160, 4
          %s164 = scalar_lea.hbm %s1, %s163
          %s166 = sshll.u32 %s164, 4
          %s167 = int_to_ptr.hbm [resolvable:$true] %s166
          %s168 = sshll.u32 [#allocation2], 4
          %s169 = int_to_ptr.vmem [resolvable:$true] %s168
          %171 = dma.hbm_to_vmem [thread:$0]  %s167, 256, %s169, [#allocation3]
        $region16: #{_forward_arrays.3} parent=11 // pred_fallthru
          _
        // Predicated region
        $region17: #{_forward_arrays.3} parent=11 // pred_check
          %p172 = pneg %p112
        $region18: #{_forward_arrays.3} parent=11 // pred_check_branch
          %174 = sbr.rel (%p172) target = $region20
        $region19: #{_forward_arrays.3} parent=11 // pred_region
          %s175 = smul.u32 4, %s21
          %177 = vsyncadd [#allocation5], 0
          %s178 = smul.addr %s175, 4
          %s179 = scalar_lea.hbm %s2, %s178
          %s181 = sshll.u32 %s179, 4
          %s182 = int_to_ptr.hbm [resolvable:$true] %s181
          %s183 = sshll.u32 [#allocation4], 4
          %s184 = int_to_ptr.vmem [resolvable:$true] %s183
          %186 = dma.hbm_to_vmem [thread:$0]  %s182, 256, %s184, [#allocation5]
        $region20: #{_forward_arrays.3} parent=11 // pred_fallthru
          _
      $region12: #{_forward_arrays.3} parent=5 // pred_fallthru
        _
      %p187 = scmp.lt.s32.totalorder %s11, 2
      // Predicated region
      $region21: #{_forward_arrays.3} parent=5 // pred_check
        %p188 = pneg %p187
      $region22: #{_forward_arrays.3} parent=5 // pred_check_branch
        %190 = sbr.rel (%p188) target = $region24
      $region23: #{_forward_arrays.3} parent=5 // pred_region
        // Predicated region
        $region25: #{_forward_arrays.3} parent=23 // pred_check
          %p191 = pneg %p54
        $region26: #{_forward_arrays.3} parent=23 // pred_check_branch
          %193 = sbr.rel (%p191) target = $region28
        $region27: #{_forward_arrays.3} parent=23 // pred_region
          %s194 = smul.u32 4, %s18
          %p195 = scmp.lt.s32.totalorder %s19, 1
          %s196 = scalar_select %p195, %s19, 1
          %p197 = scmp.lt.s32.totalorder %s20, 0
          %s198 = scalar_select %p197, %s20, 0
          %p199 = scmp.lt.s32.totalorder %s194, 3
          %s200 = scalar_select %p199, %s194, 3
          %s201 = smul.addr %s198, 4
          %s202 = sadd.s32 %s200, %s201
          %s203 = smul.addr %s196, 4
          %s204 = sadd.s32 %s202, %s203
          %s205 = smul.addr %s204, 4
          %s206 = scalar_lea.vmem %s0, %s205
          %s207 = smul.u32 4, %s18
        $region28: #{_forward_arrays.3} parent=23 // pred_fallthru
          _
      $region24: #{_forward_arrays.3} parent=5 // pred_fallthru
        _
      %p208 = scmp.le.s32.totalorder 1, %s11
      %p209 = scmp.lt.s32.totalorder %s11, 3
      %p210 = pnand %p208, %p209
      %p211 = pneg %p210
      // Predicated region
      $region29: #{_forward_arrays.3} parent=5 // pred_check
        _
      $region30: #{_forward_arrays.3} parent=5 // pred_check_branch
        %213 = sbr.rel (%p210) target = $region32
      $region31: #{_forward_arrays.3} parent=5 // pred_region
        %s214 = ssub.s32 %s11, 1
        // Predicated region
        $region33: #{_forward_arrays.3} parent=31 // pred_check
          %p215 = pneg %p86
        $region34: #{_forward_arrays.3} parent=31 // pred_check_branch
          %217 = sbr.rel (%p215) target = $region36
        $region35: #{_forward_arrays.3} parent=31 // pred_region
          %219 = dma.done [#allocation3], 256
        $region36: #{_forward_arrays.3} parent=31 // pred_fallthru
          _
        // Predicated region
        $region37: #{_forward_arrays.3} parent=31 // pred_check
          %p220 = pneg %p112
        $region38: #{_forward_arrays.3} parent=31 // pred_check_branch
          %222 = sbr.rel (%p220) target = $region40
        $region39: #{_forward_arrays.3} parent=31 // pred_region
          %224 = dma.done [#allocation5], 256
        $region40: #{_forward_arrays.3} parent=31 // pred_fallthru
          _
        %s225 = smul.u32 4, %s21
        %p226 = scmp.lt.s32.totalorder %s22, 1
        %s227 = scalar_select %p226, %s22, 1
        %p228 = scmp.lt.s32.totalorder %s23, 0
        %s229 = scalar_select %p228, %s23, 0
        %p230 = scmp.lt.s32.totalorder %s225, 3
        %s231 = scalar_select %p230, %s225, 3
        %s232 = smul.addr %s229, 4
        %s233 = sadd.s32 %s231, %s232
        %s234 = smul.addr %s227, 4
        %s235 = sadd.s32 %s233, %s234
        %s236 = smul.addr %s235, 4
        %s237 = scalar_lea.vmem %s0, %s236
        %p238 = pneg %p60
        %p239 = pneg %p57
        %p240 = pneg %p86
        %p241 = pneg %p83
        %p242 = pneg %p112
        %p243 = pneg %p109
        %p244 = pneg %p142
        %p245 = pneg %p139
        %s246 = smul.u32 4, %s21
        %p247 = scmp.lt.s32.totalorder %s22, 1
        %s248 = scalar_select %p247, %s22, 1
        %p249 = scmp.lt.s32.totalorder %s23, 0
        %s250 = scalar_select %p249, %s23, 0
        %p251 = scmp.lt.s32.totalorder %s246, 3
        %s252 = scalar_select %p251, %s246, 3
        %s253 = smul.addr %s250, 4
        %s254 = sadd.s32 %s252, %s253
        %s255 = smul.addr %s248, 16
        %s256 = sadd.s32 %s254, %s255
        %s257 = smul.addr %s256, 4
        %s258 = scalar_lea.vmem %s3, %s257
        %s259 = smul.u32 4, %s21
        %p260 = scmp.lt.s32.totalorder %s22, 1
        %s261 = scalar_select %p260, %s22, 1
        %p262 = scmp.lt.s32.totalorder %s23, 0
        %s263 = scalar_select %p262, %s23, 0
        %p264 = scmp.lt.s32.totalorder %s259, 3
        %s265 = scalar_select %p264, %s259, 3
        %s266 = smul.addr %s263, 4
        %s267 = sadd.s32 %s265, %s266
        %s268 = smul.addr %s261, 4
        %s269 = sadd.s32 %s267, %s268
        %s270 = smul.addr %s269, 4
        %s271 = scalar_lea.vmem %s0, %s270
        %s272 = smul.u32 4, %s21
        %s273 = smul.u32 4, %s21
        %s274 = smul.u32 4, %s21
        %s275 = smul.u32 4, %s21
        %p276 = scmp.lt.s32.totalorder %s22, 1
        %s277 = scalar_select %p276, %s22, 1
        %p278 = scmp.lt.s32.totalorder %s23, 0
        %s279 = scalar_select %p278, %s23, 0
        %p280 = scmp.lt.s32.totalorder %s275, 3
        %s281 = scalar_select %p280, %s275, 3
        %s282 = smul.addr %s279, 4
        %s283 = sadd.s32 %s281, %s282
        %s284 = smul.addr %s277, 16
        %s285 = sadd.s32 %s283, %s284
        %s286 = smul.addr %s285, 4
        %s287 = scalar_lea.vmem %s3, %s286
        %s288 = smul.u32 4, %s21
        %v289 = vld [vmem:[%s271] sm:$0xff]
        %v290 = vld [vmem:[%s271 + $0x8] sm:$0xff]
        %293 = vst [vmem:[#allocation1] ss:$2 sm:$0xff] %v289
        %s294 = scalar_lea.vmem [#allocation1], 16
        %295 = vst [vmem:[%s294] ss:$2 sm:$0xff] %v290
        %v296 = vld.sshfl [vmem:[#allocation1] sm:$0xff pattern:$0x75316420]
        %v297 = vld.sshfl [vmem:[#allocation1 + $0x8] sm:$0xff pattern:$0x75316420]
        %v298 = vld.sshfl [vmem:[#allocation1 + $0x10] sm:$0xff pattern:$0x75316420]
        %v299 = vld.sshfl [vmem:[#allocation1 + $0x18] sm:$0xff pattern:$0x75316420]
        %300 = vrot.lane.b32.xlu0 %v296, 127
        %v301 = vpop.permute.xlu0 %300
        %302 = vrot.lane.b32.xlu0 %v297, 127
        %v303 = vpop.permute.xlu0 %302
        %304 = vrot.lane.b32.xlu0 %v298, 127
        %v305 = vpop.permute.xlu0 %304
        %306 = vrot.lane.b32.xlu0 %v299, 127
        %v307 = vpop.permute.xlu0 %306
        %vm308 = vcmask 1039360
        %v309 = vsel %vm308, %v301, %v303
        %v310 = vsel %vm308, %v303, %v305
        %v311 = vsel %vm308, %v305, %v307
        %v316 = vsel %vm308, %v307, 0.0
        %317 = vst [vmem:[#allocation1] ss:$2 sm:$0xff] %v289
        %s318 = scalar_lea.vmem [#allocation1], 16
        %319 = vst [vmem:[%s318] ss:$2 sm:$0xff] %v290
        %v320 = vld.sshfl [vmem:[#allocation1] sm:$0xff pattern:$0x75316420]
        %v321 = vld.sshfl [vmem:[#allocation1 + $0x8] sm:$0xff pattern:$0x75316420]
        %v322 = vld.sshfl [vmem:[#allocation1 + $0x10] sm:$0xff pattern:$0x75316420]
        %v323 = vld.sshfl [vmem:[#allocation1 + $0x18] sm:$0xff pattern:$0x75316420]
        %324 = vrot.lane.b32.xlu0 %v320, 1
        %v325 = vpop.permute.xlu0 %324
        %326 = vrot.lane.b32.xlu0 %v321, 1
        %v327 = vpop.permute.xlu0 %326
        %328 = vrot.lane.b32.xlu0 %v322, 1
        %v329 = vpop.permute.xlu0 %328
        %330 = vrot.lane.b32.xlu0 %v323, 1
        %v331 = vpop.permute.xlu0 %330
        %vm332 = vcmask 7168
        %v333 = vsel %vm332, %v325, %v327
        %v334 = vsel %vm332, %v327, %v329
        %v335 = vsel %vm332, %v329, %v331
        %v340 = vsel %vm332, 0.0, %v325
        %v341 = vlaneseq
        %v342 = vand.u32 %v341, 127
        %v343 = vadd.s32 %v342, 128
        %v344 = vadd.s32 %v342, 256
        %v345 = vadd.s32 %v342, 384
        %vm346 = vcmp.lt.s32.totalorder %v342, 0
        %v347 = vsub.s32 0, %v342
        %v348 = vsel %vm346, %v347, %v342
        %v349 = vshrl.u32 %v348, 1
        %v350 = vand.u32 %v348, 1
        %v351 = vsub.s32 0, %v350
        %v352 = vsel %vm346, %v351, %v350
        %vm353 = vcmp.lt.s32.totalorder %v343, 0
        %v354 = vsub.s32 0, %v343
        %v355 = vsel %vm353, %v354, %v343
        %v356 = vshrl.u32 %v355, 1
        %v357 = vand.u32 %v355, 1
        %v358 = vsub.s32 0, %v357
        %v359 = vsel %vm353, %v358, %v357
        %vm360 = vcmp.lt.s32.totalorder %v344, 0
        %v361 = vsub.s32 0, %v344
        %v362 = vsel %vm360, %v361, %v344
        %v363 = vshrl.u32 %v362, 1
        %v364 = vand.u32 %v362, 1
        %v365 = vsub.s32 0, %v364
        %v366 = vsel %vm360, %v365, %v364
        %vm367 = vcmp.lt.s32.totalorder %v345, 0
        %v368 = vsub.s32 0, %v345
        %v369 = vsel %vm367, %v368, %v345
        %v370 = vshrl.u32 %v369, 1
        %v371 = vand.u32 %v369, 1
        %v372 = vsub.s32 0, %v371
        %v373 = vsel %vm367, %v372, %v371
        %vm374 = vcmp.ne.s32.totalorder %v352, 0
        %vm375 = vcmp.ne.s32.totalorder %v359, 0
        %vm376 = vcmp.ne.s32.totalorder %v366, 0
        %vm377 = vcmp.ne.s32.totalorder %v373, 0
        %vm378 = vcmp.lt.s32.totalorder %v352, 0
        %vm379 = vcmp.lt.s32.totalorder %v359, 0
        %vm380 = vcmp.lt.s32.totalorder %v366, 0
        %vm381 = vcmp.lt.s32.totalorder %v373, 0
        %vm382 = vmand %vm378, %vm374
        %vm383 = vmand %vm379, %vm375
        %vm384 = vmand %vm380, %vm376
        %vm385 = vmand %vm381, %vm377
        %v386 = vadd.s32 %v352, 2
        %v387 = vadd.s32 %v359, 2
        %v388 = vadd.s32 %v366, 2
        %v389 = vadd.s32 %v373, 2
        %v390 = vsel %vm382, %v386, %v352
        %v391 = vsel %vm383, %v387, %v359
        %v392 = vsel %vm384, %v388, %v366
        %v393 = vsel %vm385, %v389, %v373
        %vm394 = vcmp.eq.s32.totalorder %v390, 0
        %vm395 = vcmp.eq.s32.totalorder %v391, 0
        %vm396 = vcmp.eq.s32.totalorder %v392, 0
        %vm397 = vcmp.eq.s32.totalorder %v393, 0
        %v398 = vsel %vm394, %v309, %v340
        %v399 = vsel %vm395, %v310, %v333
        %v400 = vsel %vm396, %v311, %v334
        %v401 = vsel %vm397, %v316, %v335
        %v402 = vld [vmem:[#allocation2] ss:$4 sm:$0xf]
        %v404 = vperm.slane %v402, 0
        %v405 = vperm.slane %v402, 1
        %v406 = vperm.slane %v402, 2
        %v407 = vperm.slane %v402, 3
        %412 = vst [vmem:[#allocation1] ss:$2 sm:$0xff] %v289
        %s413 = scalar_lea.vmem [#allocation1], 16
        %414 = vst [vmem:[%s413] ss:$2 sm:$0xff] %v290
        %v415 = vld.sshfl [vmem:[#allocation1] sm:$0xff pattern:$0x75316420]
        %v416 = vld.sshfl [vmem:[#allocation1 + $0x8] sm:$0xff pattern:$0x75316420]
        %v417 = vld.sshfl [vmem:[#allocation1 + $0x10] sm:$0xff pattern:$0x75316420]
        %v418 = vld.sshfl [vmem:[#allocation1 + $0x18] sm:$0xff pattern:$0x75316420]
        %v423 = vmul.f32 %v404, %v415
        %v424 = vmul.f32 %v405, %v416
        %v425 = vmul.f32 %v406, %v417
        %v426 = vmul.f32 %v407, %v418
        %v427 = vld [vmem:[#allocation4] ss:$4 sm:$0xf]
        %v429 = vperm.slane %v427, 0
        %v430 = vperm.slane %v427, 1
        %v431 = vperm.slane %v427, 2
        %v432 = vperm.slane %v427, 3
        %v437 = vmul.f32 %v429, %v398
        %v438 = vmul.f32 %v430, %v399
        %v439 = vmul.f32 %v431, %v400
        %v440 = vmul.f32 %v432, %v401
        %v441 = vadd.f32 %v423, %v437
        %v442 = vadd.f32 %v424, %v438
        %v443 = vadd.f32 %v425, %v439
        %v444 = vadd.f32 %v426, %v440
        %v449 = vrot.slane %v442, 4
        %v450 = vrot.slane %v444, 4
        %vm451 = vcmask 1043456
        %v452 = vsel %vm451, %v441, %v449
        %v453 = vsel %vm451, %v443, %v450
        %456 = vst [vmem:[%s287] sm:$0xff] %v452
        %457 = vst [vmem:[%s287 + $0x8] sm:$0xff] %v453
        %s458 = scalar_lea.vmem [#allocation2], 1
        %v459 = vld [vmem:[%s458] ss:$4 sm:$0xf]
        %v461 = vperm.slane %v459, 0
        %v462 = vperm.slane %v459, 1
        %v463 = vperm.slane %v459, 2
        %v464 = vperm.slane %v459, 3
        %469 = vst [vmem:[#allocation1] ss:$2 sm:$0xff] %v289
        %s470 = scalar_lea.vmem [#allocation1], 16
        %471 = vst [vmem:[%s470] ss:$2 sm:$0xff] %v290
        %v472 = vld.sshfl [vmem:[#allocation1] sm:$0xff pattern:$0x75316420]
        %v473 = vld.sshfl [vmem:[#allocation1 + $0x8] sm:$0xff pattern:$0x75316420]
        %v474 = vld.sshfl [vmem:[#allocation1 + $0x10] sm:$0xff pattern:$0x75316420]
        %v475 = vld.sshfl [vmem:[#allocation1 + $0x18] sm:$0xff pattern:$0x75316420]
        %v480 = vmul.f32 %v461, %v472
        %v481 = vmul.f32 %v462, %v473
        %v482 = vmul.f32 %v463, %v474
        %v483 = vmul.f32 %v464, %v475
        %s484 = scalar_lea.vmem [#allocation4], 1
        %v485 = vld [vmem:[%s484] ss:$4 sm:$0xf]
        %v487 = vperm.slane %v485, 0
        %v488 = vperm.slane %v485, 1
        %v489 = vperm.slane %v485, 2
        %v490 = vperm.slane %v485, 3
        %v495 = vmul.f32 %v487, %v398
        %v496 = vmul.f32 %v488, %v399
        %v497 = vmul.f32 %v489, %v400
        %v498 = vmul.f32 %v490, %v401
        %v499 = vadd.f32 %v480, %v495
        %v500 = vadd.f32 %v481, %v496
        %v501 = vadd.f32 %v482, %v497
        %v502 = vadd.f32 %v483, %v498
        %v507 = vrot.slane %v500, 4
        %v508 = vrot.slane %v502, 4
        %v509 = vsel %vm451, %v499, %v507
        %v510 = vsel %vm451, %v501, %v508
        %s513 = scalar_lea.vmem %s287, 16
        %514 = vst [vmem:[%s513] sm:$0xff] %v509
        %515 = vst [vmem:[%s513 + $0x8] sm:$0xff] %v510
        %s516 = scalar_lea.vmem [#allocation2], 2
        %v517 = vld [vmem:[%s516] ss:$4 sm:$0xf]
        %v519 = vperm.slane %v517, 0
        %v520 = vperm.slane %v517, 1
        %v521 = vperm.slane %v517, 2
        %v522 = vperm.slane %v517, 3
        %527 = vst [vmem:[#allocation1] ss:$2 sm:$0xff] %v289
        %s528 = scalar_lea.vmem [#allocation1], 16
        %529 = vst [vmem:[%s528] ss:$2 sm:$0xff] %v290
        %v530 = vld.sshfl [vmem:[#allocation1] sm:$0xff pattern:$0x75316420]
        %v531 = vld.sshfl [vmem:[#allocation1 + $0x8] sm:$0xff pattern:$0x75316420]
        %v532 = vld.sshfl [vmem:[#allocation1 + $0x10] sm:$0xff pattern:$0x75316420]
        %v533 = vld.sshfl [vmem:[#allocation1 + $0x18] sm:$0xff pattern:$0x75316420]
        %v538 = vmul.f32 %v519, %v530
        %v539 = vmul.f32 %v520, %v531
        %v540 = vmul.f32 %v521, %v532
        %v541 = vmul.f32 %v522, %v533
        %s542 = scalar_lea.vmem [#allocation4], 2
        %v543 = vld [vmem:[%s542] ss:$4 sm:$0xf]
        %v545 = vperm.slane %v543, 0
        %v546 = vperm.slane %v543, 1
        %v547 = vperm.slane %v543, 2
        %v548 = vperm.slane %v543, 3
        %v553 = vmul.f32 %v545, %v398
        %v554 = vmul.f32 %v546, %v399
        %v555 = vmul.f32 %v547, %v400
        %v556 = vmul.f32 %v548, %v401
        %v557 = vadd.f32 %v538, %v553
        %v558 = vadd.f32 %v539, %v554
        %v559 = vadd.f32 %v540, %v555
        %v560 = vadd.f32 %v541, %v556
        %v565 = vrot.slane %v558, 4
        %v566 = vrot.slane %v560, 4
        %v567 = vsel %vm451, %v557, %v565
        %v568 = vsel %vm451, %v559, %v566
        %s571 = scalar_lea.vmem %s287, 32
        %572 = vst [vmem:[%s571] sm:$0xff] %v567
        %573 = vst [vmem:[%s571 + $0x8] sm:$0xff] %v568
        %s574 = scalar_lea.vmem [#allocation2], 3
        %v575 = vld [vmem:[%s574] ss:$4 sm:$0xf]
        %v577 = vperm.slane %v575, 0
        %v578 = vperm.slane %v575, 1
        %v579 = vperm.slane %v575, 2
        %v580 = vperm.slane %v575, 3
        %585 = vst [vmem:[#allocation1] ss:$2 sm:$0xff] %v289
        %s586 = scalar_lea.vmem [#allocation1], 16
        %587 = vst [vmem:[%s586] ss:$2 sm:$0xff] %v290
        %v588 = vld.sshfl [vmem:[#allocation1] sm:$0xff pattern:$0x75316420]
        %v589 = vld.sshfl [vmem:[#allocation1 + $0x8] sm:$0xff pattern:$0x75316420]
        %v590 = vld.sshfl [vmem:[#allocation1 + $0x10] sm:$0xff pattern:$0x75316420]
        %v591 = vld.sshfl [vmem:[#allocation1 + $0x18] sm:$0xff pattern:$0x75316420]
        %v596 = vmul.f32 %v577, %v588
        %v597 = vmul.f32 %v578, %v589
        %v598 = vmul.f32 %v579, %v590
        %v599 = vmul.f32 %v580, %v591
        %s600 = scalar_lea.vmem [#allocation4], 3
        %v601 = vld [vmem:[%s600] ss:$4 sm:$0xf]
        %v603 = vperm.slane %v601, 0
        %v604 = vperm.slane %v601, 1
        %v605 = vperm.slane %v601, 2
        %v606 = vperm.slane %v601, 3
        %v611 = vmul.f32 %v603, %v398
        %v612 = vmul.f32 %v604, %v399
        %v613 = vmul.f32 %v605, %v400
        %v614 = vmul.f32 %v606, %v401
        %v615 = vadd.f32 %v596, %v611
        %v616 = vadd.f32 %v597, %v612
        %v617 = vadd.f32 %v598, %v613
        %v618 = vadd.f32 %v599, %v614
        %v623 = vrot.slane %v616, 4
        %v624 = vrot.slane %v618, 4
        %v625 = vsel %vm451, %v615, %v623
        %v626 = vsel %vm451, %v617, %v624
        %s629 = scalar_lea.vmem %s287, 48
        %630 = vst [vmem:[%s629] sm:$0xff] %v625
        %631 = vst [vmem:[%s629 + $0x8] sm:$0xff] %v626
        %s632 = smul.u32 4, %s21
        %p633 = scmp.lt.s32.totalorder %s22, 1
        %s634 = scalar_select %p633, %s22, 1
        %p635 = scmp.lt.s32.totalorder %s23, 0
        %s636 = scalar_select %p635, %s23, 0
        %p637 = scmp.lt.s32.totalorder %s632, 3
        %s638 = scalar_select %p637, %s632, 3
        %s639 = smul.addr %s636, 4
        %s640 = sadd.s32 %s638, %s639
        %s641 = smul.addr %s634, 16
        %s642 = sadd.s32 %s640, %s641
        %s643 = smul.addr %s642, 4
        %s644 = scalar_lea.vmem %s3, %s643
        // Predicated region
        $region41: #{_forward_arrays.3} parent=31 // pred_check
          %p645 = pneg %p139
        $region42: #{_forward_arrays.3} parent=31 // pred_check_branch
          %647 = sbr.rel (%p645) target = $region44
        $region43: #{_forward_arrays.3} parent=31 // pred_region
          %s648 = smul.u32 4, %s21
        $region44: #{_forward_arrays.3} parent=31 // pred_fallthru
          _
      $region32: #{_forward_arrays.3} parent=5 // pred_fallthru
        _
      %p649 = scmp.le.s32.totalorder 2, %s11
      // Predicated region
      $region45: #{_forward_arrays.3} parent=5 // pred_check
        %p650 = pneg %p649
      $region46: #{_forward_arrays.3} parent=5 // pred_check_branch
        %652 = sbr.rel (%p650) target = $region48
      $region47: #{_forward_arrays.3} parent=5 // pred_region
        %s653 = ssub.s32 %s11, 2
        // Predicated region
        $region49: #{_forward_arrays.3} parent=47 // pred_check
          %p654 = pneg %p145
        $region50: #{_forward_arrays.3} parent=47 // pred_check_branch
          %656 = sbr.rel (%p654) target = $region52
        $region51: #{_forward_arrays.3} parent=47 // pred_region
          %s657 = smul.u32 4, %s24
          %p658 = scmp.lt.s32.totalorder %s25, 1
          %s659 = scalar_select %p658, %s25, 1
          %p660 = scmp.lt.s32.totalorder %s26, 0
          %s661 = scalar_select %p660, %s26, 0
          %p662 = scmp.lt.s32.totalorder %s657, 3
          %s663 = scalar_select %p662, %s657, 3
          %s664 = smul.addr %s661, 4
          %s665 = sadd.s32 %s663, %s664
          %s666 = smul.addr %s659, 16
          %s667 = sadd.s32 %s665, %s666
          %s668 = smul.addr %s667, 4
          %s669 = scalar_lea.vmem %s3, %s668
        $region52: #{_forward_arrays.3} parent=47 // pred_fallthru
          _
      $region48: #{_forward_arrays.3} parent=5 // pred_fallthru
        _
    $region6: #{_forward_arrays.3} parent=1 // loop_footer
      %s15 = sadd.s32 1, %s11
    $region7: #{_forward_arrays.3} parent=1 // loop_footer_branch
      %10 = sbr.rel target = $region3
    $region8: #{_forward_arrays.3} parent=1 // loop_exit
      _
    %670 = vsyncpa [#allocation3], 1
    %s671 = scalar_lea.sflag [#allocation3], 1
    %672 = vsyncpa %s671, 1
    %673 = vsyncpa [#allocation5], 1

// kernel: _forward_arrays.2
$region0: #{_forward_arrays.2}
  #allocation0 [shape = 'u32[]', space=smem, size = 0x4, offset = 0x4, fixed_abs, tag = 'smem constant byte address 0x4 - core index']
  #allocation1 [shape = 'u32[72,128]{1,0:T(1,128)}', space=vmem, size = 0x9000, scoped, tag = 'internal scratch']
  %s0 = inlined_call_operand.vmem [shape: f32[2,16,32], index: 0, kind: input, shape index: {}]
  %s1 = inlined_call_operand.vmem [shape: f32[2,4,16,32], index: 1, kind: output, shape index: {}]
  %s2 = sld [smem:[#allocation0]]
  $region37: #{_forward_arrays.2} parent=0
    _
  %s4 = ssub.s32 1, %s2
  %s5 = scalar_select 0, %s4, %s2
  loop: start=0, step=1, limit=4
  $region2: #{_forward_arrays.2} parent=0 // loop_pre_header
    _
  $region3: #{_forward_arrays.2} parent=0 // loop_header
    %s7 = sphi 0, %s11
    %p8 = scmp.ge.s32.totalorder %s7, 4
    %s17 = sphi 0, %s19
    %s20 = sphi 0, %s17
    %s21 = sphi 0, %s20
    %s37 = sphi 0, %s21
    %s43 = sphi 0, %s45
    %s46 = sphi 0, %s43
    %s47 = sphi 0, %s46
    %s63 = sphi 0, %s47
  $region4: #{_forward_arrays.2} parent=0 // loop_header_branch
    %10 = sbr.rel (%p8) target = $region8
  $region5: #{_forward_arrays.2} parent=0 // loop_body
    %s12 = ssub.s32 %s7, 1
    %s13 = ssub.s32 %s7, 2
    %s14 = sadd.s32 %s7, 1
    %s15 = ssub.s32 %s7, %s14
    %p16 = scmp.eq.s32.totalorder %s15, 0
    %s18 = sadd.s32 %s17, 1
    %s19 = scalar_select %p16, %s17, %s18
    %p22 = pneg %p16
    %p23 = scmp.eq.s32.totalorder %s7, 1
    %p24 = por %p22, %p23
    %p25 = scmp.ne.s32.totalorder %s17, %s20
    %p26 = scmp.eq.s32.totalorder %s7, 0
    %p27 = por %p25, %p26
    %p28 = scmp.ne.s32.totalorder %s17, %s20
    %p29 = scmp.eq.s32.totalorder %s12, 1
    %p30 = por %p28, %p29
    %p31 = scmp.ne.s32.totalorder %s20, %s21
    %p32 = scmp.eq.s32.totalorder %s12, 0
    %p33 = por %p31, %p32
    %p34 = scmp.ne.s32.totalorder %s20, %s21
    %p35 = scmp.eq.s32.totalorder %s13, 1
    %p36 = por %p34, %p35
    %p38 = scmp.ne.s32.totalorder %s21, %s37
    %p39 = scmp.eq.s32.totalorder %s13, 0
    %p40 = por %p38, %p39
    %s41 = ssub.s32 %s7, %s14
    %p42 = scmp.eq.s32.totalorder %s41, 0
    %s44 = sadd.s32 %s43, 1
    %s45 = scalar_select %p42, %s43, %s44
    %p48 = pneg %p42
    %p49 = scmp.eq.s32.totalorder %s7, 1
    %p50 = por %p48, %p49
    %p51 = scmp.ne.s32.totalorder %s43, %s46
    %p52 = scmp.eq.s32.totalorder %s7, 0
    %p53 = por %p51, %p52
    %p54 = scmp.ne.s32.totalorder %s43, %s46
    %p55 = scmp.eq.s32.totalorder %s12, 1
    %p56 = por %p54, %p55
    %p57 = scmp.ne.s32.totalorder %s46, %s47
    %p58 = scmp.eq.s32.totalorder %s12, 0
    %p59 = por %p57, %p58
    %p60 = scmp.ne.s32.totalorder %s46, %s47
    %p61 = scmp.eq.s32.totalorder %s13, 1
    %p62 = por %p60, %p61
    %p64 = scmp.ne.s32.totalorder %s47, %s63
    %p65 = scmp.eq.s32.totalorder %s13, 0
    %p66 = por %p64, %p65
    %p67 = scmp.le.s32.totalorder 1, %s7
    %p68 = scmp.lt.s32.totalorder %s7, 3
    %p69 = pnand %p67, %p68
    %p70 = pneg %p69
    // Predicated region
    $region9: #{_forward_arrays.2} parent=5 // pred_check
      _
    $region10: #{_forward_arrays.2} parent=5 // pred_check_branch
      %72 = sbr.rel (%p69) target = $region12
    $region11: #{_forward_arrays.2} parent=5 // pred_region
      %s73 = ssub.s32 %s7, 1
    $region12: #{_forward_arrays.2} parent=5 // pred_fallthru
      _
    %p74 = scmp.lt.s32.totalorder %s7, 2
    // Predicated region
    $region13: #{_forward_arrays.2} parent=5 // pred_check
      %p75 = pneg %p74
    $region14: #{_forward_arrays.2} parent=5 // pred_check_branch
      %77 = sbr.rel (%p75) target = $region16
    $region15: #{_forward_arrays.2} parent=5 // pred_region
      // Predicated region
      $region17: #{_forward_arrays.2} parent=15 // pred_check
        %p78 = pneg %p27
      $region18: #{_forward_arrays.2} parent=15 // pred_check_branch
        %80 = sbr.rel (%p78) target = $region20
      $region19: #{_forward_arrays.2} parent=15 // pred_region
        %p81 = scmp.lt.s32.totalorder %s7, 1
        %s82 = scalar_select %p81, %s7, 1
        %s83 = smul.addr %s82, 2
        %s84 = smul.addr %s83, 8
        %s85 = scalar_lea.vmem %s0, %s84
      $region20: #{_forward_arrays.2} parent=15 // pred_fallthru
        _
    $region16: #{_forward_arrays.2} parent=5 // pred_fallthru
      _
    %p86 = scmp.le.s32.totalorder 1, %s7
    %p87 = scmp.lt.s32.totalorder %s7, 3
    %p88 = pnand %p86, %p87
    %p89 = pneg %p88
    // Predicated region
    $region21: #{_forward_arrays.2} parent=5 // pred_check
      _
    $region22: #{_forward_arrays.2} parent=5 // pred_check_branch
      %91 = sbr.rel (%p88) target = $region24
    $region23: #{_forward_arrays.2} parent=5 // pred_region
      %s92 = ssub.s32 %s7, 1
      %p93 = scmp.lt.s32.totalorder %s12, 1
      %s94 = scalar_select %p93, %s12, 1
      %s95 = smul.addr %s94, 2
      %s96 = smul.addr %s95, 8
      %s97 = scalar_lea.vmem %s0, %s96
      %p98 = pneg %p33
      %p99 = pneg %p30
      %p100 = pneg %p59
      %p101 = pneg %p56
      %p102 = scmp.lt.s32.totalorder %s12, 1
      %s103 = scalar_select %p102, %s12, 1
      %s104 = smul.addr %s103, 8
      %s105 = smul.addr %s104, 8
      %s106 = scalar_lea.vmem %s1, %s105
      %p107 = scmp.lt.s32.totalorder %s12, 1
      %s108 = scalar_select %p107, %s12, 1
      %s109 = smul.addr %s108, 2
      %s110 = smul.addr %s109, 8
      %s111 = scalar_lea.vmem %s0, %s110
      %p112 = scmp.lt.s32.totalorder %s12, 1
      %s113 = scalar_select %p112, %s12, 1
      %s114 = smul.addr %s113, 8
      %s115 = smul.addr %s114, 8
      %s116 = scalar_lea.vmem %s1, %s115
      %v117 = vld [vmem:[%s111] sm:$0xff]
      %v118 = vld [vmem:[%s111 + $0x8] sm:$0xff]
      %vm121 = vcmask 1040384
      %v122 = vrot.slane %v117, 7
      %v123 = vrot.slane %v118, 7
      %v124 = vsel %vm121, %v122, %v123
      %v127 = vsel %vm121, 0.0, %v122
      %vm128 = vcmask 1046528
      %v129 = vrot.slane %v117, 1
      %v130 = vrot.slane %v118, 1
      %v131 = vsel %vm128, %v129, %v130
      %v134 = vsel %vm128, %v130, 0.0
      %135 = vrot.lane.b32.xlu0 %v117, 2
      %v136 = vpop.permute.xlu0 %135
      %137 = vrot.lane.b32.xlu0 %v118, 2
      %v138 = vpop.permute.xlu0 %137
      %vm141 = vcmask 15360
      %v142 = vsel %vm141, 0.0, %v136
      %v143 = vsel %vm141, 0.0, %v138
      %144 = vrot.lane.b32.xlu0 %v117, 126
      %v145 = vpop.permute.xlu0 %144
      %146 = vrot.lane.b32.xlu0 %v118, 126
      %v147 = vpop.permute.xlu0 %146
      %vm150 = vcmask 244736
      %v151 = vsel %vm150, %v145, 0.0
      %v152 = vsel %vm150, %v147, 0.0
      %vm153 = vcmask 261120
      %154 = vst.msk [vmem:[%s116] sm:$0xff] %vm153, %v117
      %155 = vst.msk [vmem:[%s116 + $0x8] sm:$0xff] %vm153, %v118
      %v156 = vmul.f32 %v117, -1.0
      %v157 = vmul.f32 %v118, -1.0
      %v158 = vadd.f32 %v156, %v151
      %v159 = vadd.f32 %v157, %v152
      %s160 = scalar_lea.vmem %s116, 16
      %161 = vst.msk [vmem:[%s160] sm:$0xff] %vm153, %v158
      %162 = vst.msk [vmem:[%s160 + $0x8] sm:$0xff] %vm153, %v159
      %v163 = vmul.f32 %v117, 5.0
      %v164 = vmul.f32 %v118, 5.0
      %v165 = vmul.f32 %v127, -1.0
      %v166 = vmul.f32 %v124, -1.0
      %v167 = vadd.f32 %v163, %v165
      %v168 = vadd.f32 %v164, %v166
      %v169 = vmul.f32 %v131, -1.0
      %v170 = vmul.f32 %v134, -1.0
      %v171 = vadd.f32 %v167, %v169
      %v172 = vadd.f32 %v168, %v170
      %v173 = vmul.f32 %v142, -1.0
      %v174 = vmul.f32 %v143, -1.0
      %v175 = vadd.f32 %v171, %v173
      %v176 = vadd.f32 %v172, %v174
      %v177 = vmul.f32 %v151, -1.0
      %v178 = vmul.f32 %v152, -1.0
      %v179 = vadd.f32 %v175, %v177
      %v180 = vadd.f32 %v176, %v178
      %s181 = scalar_lea.vmem %s116, 32
      %182 = vst.msk [vmem:[%s181] sm:$0xff] %vm153, %v179
      %183 = vst.msk [vmem:[%s181 + $0x8] sm:$0xff] %vm153, %v180
      %v184 = vmul.f32 %v117, -4.0
      %v185 = vmul.f32 %v118, -4.0
      %v186 = vadd.f32 %v184, %v127
      %v187 = vadd.f32 %v185, %v124
      %v188 = vadd.f32 %v186, %v131
      %v189 = vadd.f32 %v187, %v134
      %v190 = vadd.f32 %v188, %v142
      %v191 = vadd.f32 %v189, %v143
      %v192 = vadd.f32 %v190, %v151
      %v193 = vadd.f32 %v191, %v152
      %s194 = scalar_lea.vmem %s116, 48
      %195 = vst.msk [vmem:[%s194] sm:$0xff] %vm153, %v192
      %196 = vst.msk [vmem:[%s194 + $0x8] sm:$0xff] %vm153, %v193
      %p197 = scmp.lt.s32.totalorder %s12, 1
      %s198 = scalar_select %p197, %s12, 1
      %s199 = smul.addr %s198, 8
      %s200 = smul.addr %s199, 8
      %s201 = scalar_lea.vmem %s1, %s200
      // Predicated region
      $region25: #{_forward_arrays.2} parent=23 // pred_check
        %p202 = pneg %p56
      $region26: #{_forward_arrays.2} parent=23 // pred_check_branch
        %204 = sbr.rel (%p202) target = $region28
      $region27: #{_forward_arrays.2} parent=23 // pred_region
        _
      $region28: #{_forward_arrays.2} parent=23 // pred_fallthru
        _
    $region24: #{_forward_arrays.2} parent=5 // pred_fallthru
      _
    %p205 = scmp.le.s32.totalorder 2, %s7
    // Predicated region
    $region29: #{_forward_arrays.2} parent=5 // pred_check
      %p206 = pneg %p205
    $region30: #{_forward_arrays.2} parent=5 // pred_check_branch
      %208 = sbr.rel (%p206) target = $region32
    $region31: #{_forward_arrays.2} parent=5 // pred_region
      %s209 = ssub.s32 %s7, 2
      // Predicated region
      $region33: #{_forward_arrays.2} parent=31 // pred_check
        %p210 = pneg %p62
      $region34: #{_forward_arrays.2} parent=31 // pred_check_branch
        %212 = sbr.rel (%p210) target = $region36
      $region35: #{_forward_arrays.2} parent=31 // pred_region
        %p213 = scmp.lt.s32.totalorder %s13, 1
        %s214 = scalar_select %p213, %s13, 1
        %s215 = smul.addr %s214, 8
        %s216 = smul.addr %s215, 8
        %s217 = scalar_lea.vmem %s1, %s216
      $region36: #{_forward_arrays.2} parent=31 // pred_fallthru
        _
    $region32: #{_forward_arrays.2} parent=5 // pred_fallthru
      _
  $region6: #{_forward_arrays.2} parent=0 // loop_footer
    %s11 = sadd.s32 1, %s7
  $region7: #{_forward_arrays.2} parent=0 // loop_footer_branch
    %6 = sbr.rel target = $region3
  $region8: #{_forward_arrays.2} parent=0 // loop_exit
    _

</llo_original>
